<compile_context>
chip_gen: v6e
topology: v6e:2x2x1
jax: 0.10.0
libtpu: 0.0.40
codegen_flags: <defaults>
</compile_context>

<pallas_src>
import functools

import jax
import jax.numpy as jnp
from jax import lax
from jax.experimental import pallas as pl
from jax.experimental.pallas import tpu as pltpu

EMB = 200        # embedding dim (only appears in the one-time weight prep)
HID = 256        # RNN hidden size
FC1 = 64         # fc1 output size
SEQ = 8          # sequence length (time-major)
BATCH = 2        # real batch size
VOCAB = 50       # vocabulary size
VOCAB_PAD = 128  # vocab padded to a full lane group for the one-hot matmul
OUT_LANES = 128  # lane-dense output block width


def rnn_fc_kernel(ids_ref, ptab_ref, whh_ref, w1_ref, tail_ref, out_ref):
    """Fused embedding-gather + tanh-RNN recurrence + fc1/sigmoid/fc2.

    ids_ref  : (SEQ*BLOCK_B, 1) int32  token ids for this batch block,
               row index = t*BLOCK_B + b (pad rows hold id 0, discarded later)
    ptab_ref : (VOCAB_PAD, HID) f32    emb @ W_ih^T with (b_ih + b_hh) folded in
    whh_ref  : (HID, HID)              W_hh^T
    w1_ref   : (HID, FC1)              fc1 weight^T
    tail_ref : (8, 128)                row0[:FC1]=b_fc1, row1[:FC1]=w_fc2, row2[0]=b_fc2
    out_ref  : (BLOCK_B, 128)          lane-dense result block
    """
    sb = ids_ref.shape[0]
    bpad, lanes = out_ref.shape
    seq = sb // bpad
    hid = whh_ref.shape[0]
    fc1 = w1_ref.shape[1]
    vocab_pad = ptab_ref.shape[0]

    # --- Fused embedding gather + input projection (+ bias, folded into ptab):
    # one aligned MXU matmul, hoisted out of the recurrence so the serial
    # chain only contains h @ W_hh^T.  Any id >= VOCAB_PAD would map to an
    # all-zero one-hot row (bias-only u); harmless here since VOCAB=50 < 128.
    lane_ids = lax.broadcasted_iota(jnp.int32, (sb, vocab_pad), 1)
    one_hot = (lane_ids == ids_ref[...]).astype(jnp.float32)      # (SB, VPAD)
    u = jnp.dot(one_hot, ptab_ref[...],
                preferred_element_type=jnp.float32)               # (SB, HID)

    # --- Recurrence: hidden state + projections carried in vregs -------------
    whh = whh_ref[...]   # hoisted; see TODO(synk) above on explicit MXU staging
    h = jnp.zeros((bpad, hid), jnp.float32)
    for t in range(seq):                     # static unroll; aligned row slices
        u_t = u[t * bpad:(t + 1) * bpad, :]
        h = jnp.tanh(u_t + jnp.dot(h, whh, preferred_element_type=jnp.float32))

    # --- fc1 + sigmoid (pad rows never mix with real rows) -------------------
    b1 = tail_ref[0:1, 0:fc1]                                     # (1, FC1)
    w2 = tail_ref[1:2, 0:fc1]                                     # (1, FC1)
    b2 = tail_ref[2:3, 0:1]                                       # (1, 1)
    z1 = jax.nn.sigmoid(jnp.dot(h, w1_ref[...],
                                preferred_element_type=jnp.float32) + b1)
    # --- fc2 (N=1) as VPU multiply + lane reduction; broadcast lane-dense ----
    out = jnp.sum(z1 * w2, axis=-1, keepdims=True) + b2           # (BPAD, 1)
    out_ref[...] = jnp.broadcast_to(out, (bpad, lanes))


def prepare_params(params):
    """One-time weight prep, outside the per-call path."""
    proj = params["emb"] @ params["w_ih"].T                       # (VOCAB, HID)
    ptab = jnp.zeros((VOCAB_PAD, HID), jnp.float32).at[:VOCAB].set(proj)
    ptab = ptab + (params["b_ih"] + params["b_hh"])[None, :]      # bias folded in
    tail = jnp.zeros((8, 128), jnp.float32)
    tail = tail.at[0, :FC1].set(params["b_fc1"])
    tail = tail.at[1, :FC1].set(params["w_fc2"].reshape(FC1))
    tail = tail.at[2, 0].set(params["b_fc2"][0])
    return {
        "ptab":  ptab,                 # (VOCAB_PAD, HID)
        "whh_t": params["w_hh"].T,     # (HID, HID)
        "w1_t":  params["w_fc1"].T,    # (HID, FC1)
        "tail":  tail,                 # (8, 128)
    }


@functools.partial(jax.jit, static_argnames=("block_b",))
def rnn_forward(text, prep, block_b=8):
    """text: (SEQ, BATCH) int32 token ids. Returns (BATCH, 1) f32.

    block_b: batch rows per grid step (multiple of 8).  Raise to 128-256 when
    serving many sequences so each recurrence matmul fills the MXU rows and
    the parallel grid axis shards blocks across TensorCores (v7x).
    """
    seq, batch = text.shape
    num_blocks = pl.cdiv(batch, block_b)
    batch_pad = num_blocks * block_b

    ids = jnp.pad(text, ((0, 0), (0, batch_pad - batch))).astype(jnp.int32)
    # (SEQ, Bpad) -> (num_blocks, SEQ, block_b) -> rows grouped per batch block
    ids = ids.reshape(seq, num_blocks, block_b).transpose(1, 0, 2)
    ids = ids.reshape(num_blocks * seq * block_b, 1)

    const = lambda b: (0, 0)    # weights resident in VMEM across all blocks
    out = pl.pallas_call(
        rnn_fc_kernel,
        out_shape=jax.ShapeDtypeStruct((num_blocks * block_b, OUT_LANES),
                                       jnp.float32),
        grid=(num_blocks,),
        in_specs=[
            pl.BlockSpec((seq * block_b, 1), lambda b: (b, 0)),
            pl.BlockSpec((VOCAB_PAD, HID), const),
            pl.BlockSpec((HID, HID), const),
            pl.BlockSpec((HID, FC1), const),
            pl.BlockSpec((8, 128), const),
        ],
        out_specs=pl.BlockSpec((block_b, OUT_LANES), lambda b: (b, 0)),
        compiler_params=pltpu.CompilerParams(
            dimension_semantics=("parallel",)),
    )(ids, prep["ptab"], prep["whh_t"], prep["w1_t"], prep["tail"])
    return out[:batch, :1]


def reference_forward(text, params):
    """Pure-JAX reference reproducing the PyTorch forward (highest precision)."""
    hp = lax.Precision.HIGHEST
    embedded = jnp.take(params["emb"], text, axis=0)              # (SEQ, B, EMB)
    h = jnp.zeros((text.shape[1], HID), jnp.float32)
    for t in range(text.shape[0]):
        h = jnp.tanh(jnp.dot(embedded[t], params["w_ih"].T, precision=hp)
                     + jnp.dot(h, params["w_hh"].T, precision=hp)
                     + params["b_ih"] + params["b_hh"])
    z1 = jax.nn.sigmoid(jnp.dot(h, params["w_fc1"].T, precision=hp)
                        + params["b_fc1"])
    return jnp.dot(z1, params["w_fc2"].T, precision=hp) + params["b_fc2"]


def init_params(key):
    ks = jax.random.split(key, 9)
    def u(k, shape, scale):
        return jax.random.uniform(k, shape, jnp.float32, -scale, scale)
    s_rnn = 1.0 / jnp.sqrt(HID)
    s_fc1 = 1.0 / jnp.sqrt(HID)
    s_fc2 = 1.0 / jnp.sqrt(FC1)
    return {
        "emb":   jax.random.normal(ks[0], (VOCAB, EMB), jnp.float32),
        "w_ih":  u(ks[1], (HID, EMB), s_rnn),
        "w_hh":  u(ks[2], (HID, HID), s_rnn),
        "b_ih":  u(ks[3], (HID,), s_rnn),
        "b_hh":  u(ks[4], (HID,), s_rnn),
        "w_fc1": u(ks[5], (FC1, HID), s_fc1),
        "b_fc1": u(ks[6], (FC1,), s_fc1),
        "w_fc2": u(ks[7], (1, FC1), s_fc2),
        "b_fc2": u(ks[8], (1,), s_fc2),
    }


if __name__ == "__main__":
    key = jax.random.PRNGKey(0)
    k_p, k_x = jax.random.split(key)
    params = init_params(k_p)
    text = jax.random.randint(k_x, (SEQ, BATCH), 0, VOCAB, dtype=jnp.int32)

    prep = prepare_params(params)
    out = rnn_forward(text, prep)
    out = jax.block_until_ready(out)

    ref = reference_forward(text, params)
    assert out.shape == (BATCH, 1)
    assert jnp.allclose(out, ref, atol=1e-4, rtol=1e-4), (out, ref)
    print("KERNEL_OK")
</pallas_src>

<mosaic_0001>
module attributes {stable_mosaic.version = 11 : i64} {
  func.func @rnn_fc_kernel(%arg0: i32, %arg1: memref<64x1xi32, #tpu.memory_space<vmem>>, %arg2: memref<128x256xf32, #tpu.memory_space<vmem>>, %arg3: memref<256x256xf32, #tpu.memory_space<vmem>>, %arg4: memref<256x64xf32, #tpu.memory_space<vmem>>, %arg5: memref<8x128xf32, #tpu.memory_space<vmem>>, %arg6: memref<8x128xf32, #tpu.memory_space<vmem>>) attributes {dimension_semantics = [#tpu.dimension_semantics<parallel>], iteration_bounds = array<i64: 1>, scalar_prefetch = 0 : i64, scratch_operands = 0 : i64, tpu.core_type = #tpu.core_type<tc>, window_params = [{transform_indices = @transform_0, window_bounds = array<i64: 64, 1>}, {pipeline_mode = #tpu.pipeline_mode<synchronous>, transform_indices = @transform_1, window_bounds = array<i64: 128, 256>}, {pipeline_mode = #tpu.pipeline_mode<synchronous>, transform_indices = @transform_2, window_bounds = array<i64: 256, 256>}, {pipeline_mode = #tpu.pipeline_mode<synchronous>, transform_indices = @transform_3, window_bounds = array<i64: 256, 64>}, {pipeline_mode = #tpu.pipeline_mode<synchronous>, transform_indices = @transform_4, window_bounds = array<i64: 8, 128>}, {transform_indices = @transform_5, window_bounds = array<i64: 8, 128>}]} {
    %0 = tpu.iota {dimensions = array<i32: 1>} : vector<64x128xi32>
    %c0 = arith.constant 0 : index
    %c0_0 = arith.constant 0 : index
    %1 = vector.load %arg1[%c0, %c0_0] : memref<64x1xi32, #tpu.memory_space<vmem>>, vector<64x1xi32>
    %2 = vector.broadcast %1 : vector<64x1xi32> to vector<64x128xi32>
    %3 = arith.cmpi eq, %0, %2 : vector<64x128xi32>
    %4 = arith.extui %3 : vector<64x128xi1> to vector<64x128xi32>
    %5 = arith.sitofp %4 : vector<64x128xi32> to vector<64x128xf32>
    %c0_1 = arith.constant 0 : index
    %c0_2 = arith.constant 0 : index
    %6 = vector.load %arg2[%c0_1, %c0_2] : memref<128x256xf32, #tpu.memory_space<vmem>>, vector<128x256xf32>
    %cst = arith.constant dense<0.000000e+00> : vector<64x256xf32>
    %7 = tpu.matmul %5, %6, %cst {dimension_numbers = #tpu.dot_dimension_numbers<[1], [0], [0], [1], [0, 0, 1, 1], [], []>} : vector<64x128xf32>, vector<128x256xf32>, vector<64x256xf32> -> vector<64x256xf32>
    %c0_3 = arith.constant 0 : index
    %c0_4 = arith.constant 0 : index
    %8 = vector.load %arg3[%c0_3, %c0_4] : memref<256x256xf32, #tpu.memory_space<vmem>>, vector<256x256xf32>
    %cst_5 = arith.constant 0.000000e+00 : f32
    %9 = vector.broadcast %cst_5 : f32 to vector<8x256xf32>
    %10 = vector.extract_strided_slice %7 {offsets = [0, 0], sizes = [8, 256], strides = [1, 1]} : vector<64x256xf32> to vector<8x256xf32>
    %cst_6 = arith.constant dense<0.000000e+00> : vector<8x256xf32>
    %11 = tpu.matmul %9, %8, %cst_6 {dimension_numbers = #tpu.dot_dimension_numbers<[1], [0], [0], [1], [0, 0, 1, 1], [], []>} : vector<8x256xf32>, vector<256x256xf32>, vector<8x256xf32> -> vector<8x256xf32>
    %12 = arith.addf %10, %11 : vector<8x256xf32>
    %13 = math.tanh %12 : vector<8x256xf32>
    %14 = vector.extract_strided_slice %7 {offsets = [8, 0], sizes = [8, 256], strides = [1, 1]} : vector<64x256xf32> to vector<8x256xf32>
    %cst_7 = arith.constant dense<0.000000e+00> : vector<8x256xf32>
    %15 = tpu.matmul %13, %8, %cst_7 {dimension_numbers = #tpu.dot_dimension_numbers<[1], [0], [0], [1], [0, 0, 1, 1], [], []>} : vector<8x256xf32>, vector<256x256xf32>, vector<8x256xf32> -> vector<8x256xf32>
    %16 = arith.addf %14, %15 : vector<8x256xf32>
    %17 = math.tanh %16 : vector<8x256xf32>
    %18 = vector.extract_strided_slice %7 {offsets = [16, 0], sizes = [8, 256], strides = [1, 1]} : vector<64x256xf32> to vector<8x256xf32>
    %cst_8 = arith.constant dense<0.000000e+00> : vector<8x256xf32>
    %19 = tpu.matmul %17, %8, %cst_8 {dimension_numbers = #tpu.dot_dimension_numbers<[1], [0], [0], [1], [0, 0, 1, 1], [], []>} : vector<8x256xf32>, vector<256x256xf32>, vector<8x256xf32> -> vector<8x256xf32>
    %20 = arith.addf %18, %19 : vector<8x256xf32>
    %21 = math.tanh %20 : vector<8x256xf32>
    %22 = vector.extract_strided_slice %7 {offsets = [24, 0], sizes = [8, 256], strides = [1, 1]} : vector<64x256xf32> to vector<8x256xf32>
    %cst_9 = arith.constant dense<0.000000e+00> : vector<8x256xf32>
    %23 = tpu.matmul %21, %8, %cst_9 {dimension_numbers = #tpu.dot_dimension_numbers<[1], [0], [0], [1], [0, 0, 1, 1], [], []>} : vector<8x256xf32>, vector<256x256xf32>, vector<8x256xf32> -> vector<8x256xf32>
    %24 = arith.addf %22, %23 : vector<8x256xf32>
    %25 = math.tanh %24 : vector<8x256xf32>
    %26 = vector.extract_strided_slice %7 {offsets = [32, 0], sizes = [8, 256], strides = [1, 1]} : vector<64x256xf32> to vector<8x256xf32>
    %cst_10 = arith.constant dense<0.000000e+00> : vector<8x256xf32>
    %27 = tpu.matmul %25, %8, %cst_10 {dimension_numbers = #tpu.dot_dimension_numbers<[1], [0], [0], [1], [0, 0, 1, 1], [], []>} : vector<8x256xf32>, vector<256x256xf32>, vector<8x256xf32> -> vector<8x256xf32>
    %28 = arith.addf %26, %27 : vector<8x256xf32>
    %29 = math.tanh %28 : vector<8x256xf32>
    %30 = vector.extract_strided_slice %7 {offsets = [40, 0], sizes = [8, 256], strides = [1, 1]} : vector<64x256xf32> to vector<8x256xf32>
    %cst_11 = arith.constant dense<0.000000e+00> : vector<8x256xf32>
    %31 = tpu.matmul %29, %8, %cst_11 {dimension_numbers = #tpu.dot_dimension_numbers<[1], [0], [0], [1], [0, 0, 1, 1], [], []>} : vector<8x256xf32>, vector<256x256xf32>, vector<8x256xf32> -> vector<8x256xf32>
    %32 = arith.addf %30, %31 : vector<8x256xf32>
    %33 = math.tanh %32 : vector<8x256xf32>
    %34 = vector.extract_strided_slice %7 {offsets = [48, 0], sizes = [8, 256], strides = [1, 1]} : vector<64x256xf32> to vector<8x256xf32>
    %cst_12 = arith.constant dense<0.000000e+00> : vector<8x256xf32>
    %35 = tpu.matmul %33, %8, %cst_12 {dimension_numbers = #tpu.dot_dimension_numbers<[1], [0], [0], [1], [0, 0, 1, 1], [], []>} : vector<8x256xf32>, vector<256x256xf32>, vector<8x256xf32> -> vector<8x256xf32>
    %36 = arith.addf %34, %35 : vector<8x256xf32>
    %37 = math.tanh %36 : vector<8x256xf32>
    %38 = vector.extract_strided_slice %7 {offsets = [56, 0], sizes = [8, 256], strides = [1, 1]} : vector<64x256xf32> to vector<8x256xf32>
    %cst_13 = arith.constant dense<0.000000e+00> : vector<8x256xf32>
    %39 = tpu.matmul %37, %8, %cst_13 {dimension_numbers = #tpu.dot_dimension_numbers<[1], [0], [0], [1], [0, 0, 1, 1], [], []>} : vector<8x256xf32>, vector<256x256xf32>, vector<8x256xf32> -> vector<8x256xf32>
    %40 = arith.addf %38, %39 : vector<8x256xf32>
    %41 = math.tanh %40 : vector<8x256xf32>
    %c0_14 = arith.constant 0 : index
    %c0_15 = arith.constant 0 : index
    %42 = vector.load %arg5[%c0_14, %c0_15] : memref<8x128xf32, #tpu.memory_space<vmem>>, vector<1x64xf32>
    %c1 = arith.constant 1 : index
    %c0_16 = arith.constant 0 : index
    %43 = vector.load %arg5[%c1, %c0_16] : memref<8x128xf32, #tpu.memory_space<vmem>>, vector<1x64xf32>
    %c2 = arith.constant 2 : index
    %c0_17 = arith.constant 0 : index
    %44 = vector.load %arg5[%c2, %c0_17] : memref<8x128xf32, #tpu.memory_space<vmem>>, vector<1x1xf32>
    %c0_18 = arith.constant 0 : index
    %c0_19 = arith.constant 0 : index
    %45 = vector.load %arg4[%c0_18, %c0_19] : memref<256x64xf32, #tpu.memory_space<vmem>>, vector<256x64xf32>
    %cst_20 = arith.constant dense<0.000000e+00> : vector<8x64xf32>
    %46 = tpu.matmul %41, %45, %cst_20 {dimension_numbers = #tpu.dot_dimension_numbers<[1], [0], [0], [1], [0, 0, 1, 1], [], []>} : vector<8x256xf32>, vector<256x64xf32>, vector<8x64xf32> -> vector<8x64xf32>
    %47 = vector.broadcast %42 : vector<1x64xf32> to vector<8x64xf32>
    %48 = arith.addf %46, %47 : vector<8x64xf32>
    %49 = arith.negf %48 : vector<8x64xf32>
    %50 = math.exp %49 : vector<8x64xf32>
    %cst_21 = arith.constant 1.000000e+00 : f32
    %51 = vector.broadcast %cst_21 : f32 to vector<8x64xf32>
    %52 = arith.addf %51, %50 : vector<8x64xf32>
    %53 = arith.divf %51, %52 : vector<8x64xf32>
    %54 = vector.broadcast %43 : vector<1x64xf32> to vector<8x64xf32>
    %55 = arith.mulf %53, %54 : vector<8x64xf32>
    %cst_22 = arith.constant dense<0.000000e+00> : vector<8xf32>
    %56 = vector.multi_reduction <add>, %55, %cst_22 [1] : vector<8x64xf32> to vector<8xf32>
    %57 = vector.shape_cast %56 : vector<8xf32> to vector<8x1xf32>
    %58 = vector.broadcast %44 : vector<1x1xf32> to vector<8x1xf32>
    %59 = arith.addf %57, %58 : vector<8x1xf32>
    %60 = vector.shape_cast %59 : vector<8x1xf32> to vector<8x1xf32>
    %61 = vector.broadcast %60 : vector<8x1xf32> to vector<8x128xf32>
    %c0_23 = arith.constant 0 : index
    %c0_24 = arith.constant 0 : index
    %62 = vector.load %arg6[%c0_23, %c0_24] : memref<8x128xf32, #tpu.memory_space<vmem>>, vector<8x128xf32>
    tpu.vector_store %arg6[%c0_23, %c0_24], %61 {strides = array<i32>} : memref<8x128xf32, #tpu.memory_space<vmem>>, vector<8x128xf32>,
    return
  }
  func.func @transform_0(%arg0: i32) -> (i32, i32) {
    %c0_i32 = arith.constant 0 : i32
    %c0_i32_0 = arith.constant 0 : i32
    return %arg0, %c0_i32 : i32, i32
  }
  func.func @transform_1(%arg0: i32) -> (i32, i32) {
    %c0_i32 = arith.constant 0 : i32
    %c0_i32_0 = arith.constant 0 : i32
    %c0_i32_1 = arith.constant 0 : i32
    return %c0_i32, %c0_i32_0 : i32, i32
  }
  func.func @transform_2(%arg0: i32) -> (i32, i32) {
    %c0_i32 = arith.constant 0 : i32
    %c0_i32_0 = arith.constant 0 : i32
    %c0_i32_1 = arith.constant 0 : i32
    return %c0_i32, %c0_i32_0 : i32, i32
  }
  func.func @transform_3(%arg0: i32) -> (i32, i32) {
    %c0_i32 = arith.constant 0 : i32
    %c0_i32_0 = arith.constant 0 : i32
    %c0_i32_1 = arith.constant 0 : i32
    return %c0_i32, %c0_i32_0 : i32, i32
  }
  func.func @transform_4(%arg0: i32) -> (i32, i32) {
    %c0_i32 = arith.constant 0 : i32
    %c0_i32_0 = arith.constant 0 : i32
    %c0_i32_1 = arith.constant 0 : i32
    return %c0_i32, %c0_i32_0 : i32, i32
  }
  func.func @transform_5(%arg0: i32) -> (i32, i32) {
    %c0_i32 = arith.constant 0 : i32
    %c0_i32_0 = arith.constant 0 : i32
    return %arg0, %c0_i32 : i32, i32
  }
}

</mosaic_0001>

<llo_original>
// kernel: rnn_forward.1
$region0: #{rnn_forward.1}
  #allocation0 [shape = 'u32[]', space=smem, size = 0x4, offset = 0x4, fixed_abs, tag = 'smem constant byte address 0x4 - core index']
  #allocation1 [shape = 'u32[144,128]{1,0:T(1,128)}', space=vmem, size = 0x12000, scoped, tag = 'internal scratch']
  %s0 = inlined_call_operand.vmem [shape: s32[64,1], index: 0, kind: input, shape index: {}]
  %s1 = inlined_call_operand.vmem [shape: f32[128,256], index: 1, kind: input, shape index: {}]
  %s2 = inlined_call_operand.hbm [shape: f32[256,256], index: 2, kind: input, shape index: {}]
  %s3 = inlined_call_operand.vmem [shape: f32[256,64], index: 3, kind: input, shape index: {}]
  %s4 = inlined_call_operand.vmem [shape: f32[8,128], index: 4, kind: input, shape index: {}]
  %s5 = inlined_call_operand.vmem [shape: f32[8,128], index: 5, kind: output, shape index: {}]
  %s6 = sld [smem:[#allocation0]]
  $region34: #{rnn_forward.1} parent=0
    _
  %s8 = ssub.s32 1, %s6
  %s9 = scalar_select 0, %s8, %s6
  $region1: #{rnn_forward.1} parent=0
    #allocation2 [shape = 'u8[262144]{0}', space=vmem, size = 0x40000, scoped, tag = 'input window, operand 2, single buffered']
    #allocation3 [shape = 's32[1]{0}', space=sflag, size = 0x4, scoped, tag = 'scoped memory for rnn_forward.1']
    %10 = vsyncpa [#allocation3], 0
    // Predicated region
    $region2: #{rnn_forward.1} parent=1 // pred_check
      _
    $region3: #{rnn_forward.1} parent=1 // pred_check_branch
      %12 = sbr.rel (0) target = $region5
    $region4: #{rnn_forward.1} parent=1 // pred_region
      _
    $region5: #{rnn_forward.1} parent=1 // pred_fallthru
      _
    // Predicated region
    $region6: #{rnn_forward.1} parent=1 // pred_check
      _
    $region7: #{rnn_forward.1} parent=1 // pred_check_branch
      %14 = sbr.rel (0) target = $region9
    $region8: #{rnn_forward.1} parent=1 // pred_region
      _
    $region9: #{rnn_forward.1} parent=1 // pred_fallthru
      _
    // Predicated region
    $region10: #{rnn_forward.1} parent=1 // pred_check
      _
    $region11: #{rnn_forward.1} parent=1 // pred_check_branch
      %16 = sbr.rel (0) target = $region13
    $region12: #{rnn_forward.1} parent=1 // pred_region
      %s18 = ssub.s32 8192, 8192
      %19 = vsyncadd [#allocation3], %s18
      %s20 = sshll.u32 [#allocation2], 4
      %s21 = int_to_ptr.vmem [resolvable:$true] %s20
      %26 = dma.hbm_to_vmem [thread:$0]  %s2, 8192, %s21, [#allocation3], 256, 256, 16
    $region13: #{rnn_forward.1} parent=1 // pred_fallthru
      _
    // Predicated region
    $region14: #{rnn_forward.1} parent=1 // pred_check
      _
    $region15: #{rnn_forward.1} parent=1 // pred_check_branch
      %28 = sbr.rel (0) target = $region17
    $region16: #{rnn_forward.1} parent=1 // pred_region
      _
    $region17: #{rnn_forward.1} parent=1 // pred_fallthru
      _
    // Predicated region
    $region18: #{rnn_forward.1} parent=1 // pred_check
      _
    $region19: #{rnn_forward.1} parent=1 // pred_check_branch
      %30 = sbr.rel (0) target = $region21
    $region20: #{rnn_forward.1} parent=1 // pred_region
      _
    $region21: #{rnn_forward.1} parent=1 // pred_fallthru
      _
    // Predicated region
    $region22: #{rnn_forward.1} parent=1 // pred_check
      _
    $region23: #{rnn_forward.1} parent=1 // pred_check_branch
      %32 = sbr.rel (0) target = $region25
    $region24: #{rnn_forward.1} parent=1 // pred_region
      %33 = dma.done [#allocation3], 8192
    $region25: #{rnn_forward.1} parent=1 // pred_fallthru
      _
    %v34 = vlaneseq
    %v35 = vand.u32 %v34, 127
    %v36 = vld [vmem:[%s0] sm:$0xff]
    %v37 = vld [vmem:[%s0 + $0x8] sm:$0xff]
    %v38 = vld [vmem:[%s0 + $0x10] sm:$0xff]
    %v39 = vld [vmem:[%s0 + $0x18] sm:$0xff]
    %v40 = vld [vmem:[%s0 + $0x20] sm:$0xff]
    %v41 = vld [vmem:[%s0 + $0x28] sm:$0xff]
    %v42 = vld [vmem:[%s0 + $0x30] sm:$0xff]
    %v43 = vld [vmem:[%s0 + $0x38] sm:$0xff]
    %44 = vset.pattern.permute.xlu0 0
    %45 = vperm.xlu0 %44, %v36
    %v46 = vpop.permute.xlu0 %45
    %47 = vset.pattern.permute.xlu0 0
    %48 = vperm.xlu0 %47, %v37
    %v49 = vpop.permute.xlu0 %48
    %50 = vset.pattern.permute.xlu0 0
    %51 = vperm.xlu0 %50, %v38
    %v52 = vpop.permute.xlu0 %51
    %53 = vset.pattern.permute.xlu0 0
    %54 = vperm.xlu0 %53, %v39
    %v55 = vpop.permute.xlu0 %54
    %56 = vset.pattern.permute.xlu0 0
    %57 = vperm.xlu0 %56, %v40
    %v58 = vpop.permute.xlu0 %57
    %59 = vset.pattern.permute.xlu0 0
    %60 = vperm.xlu0 %59, %v41
    %v61 = vpop.permute.xlu0 %60
    %62 = vset.pattern.permute.xlu0 0
    %63 = vperm.xlu0 %62, %v42
    %v64 = vpop.permute.xlu0 %63
    %65 = vset.pattern.permute.xlu0 0
    %66 = vperm.xlu0 %65, %v43
    %v67 = vpop.permute.xlu0 %66
    %vm68 = vcmp.eq.s32.totalorder %v35, %v46
    %vm69 = vcmp.eq.s32.totalorder %v35, %v49
    %vm70 = vcmp.eq.s32.totalorder %v35, %v52
    %vm71 = vcmp.eq.s32.totalorder %v35, %v55
    %vm72 = vcmp.eq.s32.totalorder %v35, %v58
    %vm73 = vcmp.eq.s32.totalorder %v35, %v61
    %vm74 = vcmp.eq.s32.totalorder %v35, %v64
    %vm75 = vcmp.eq.s32.totalorder %v35, %v67
    %v76 = vsel %vm68, 1, 0
    %v77 = vsel %vm69, 1, 0
    %v78 = vsel %vm70, 1, 0
    %v79 = vsel %vm71, 1, 0
    %v80 = vsel %vm72, 1, 0
    %v81 = vsel %vm73, 1, 0
    %v82 = vsel %vm74, 1, 0
    %v83 = vsel %vm75, 1, 0
    %v84 = vcvt.s32.f32 %v76
    %v85 = vcvt.s32.f32 %v77
    %v86 = vcvt.s32.f32 %v78
    %v87 = vcvt.s32.f32 %v79
    %v88 = vcvt.s32.f32 %v80
    %v89 = vcvt.s32.f32 %v81
    %v90 = vcvt.s32.f32 %v82
    %v91 = vcvt.s32.f32 %v83
    %v92 = vld [vmem:[%s1] sm:$0xff]
    %v93 = vld [vmem:[%s1 + $0x8] sm:$0xff]
    %v94 = vld [vmem:[%s1 + $0x10] sm:$0xff]
    %v95 = vld [vmem:[%s1 + $0x18] sm:$0xff]
    %v96 = vld [vmem:[%s1 + $0x20] sm:$0xff]
    %v97 = vld [vmem:[%s1 + $0x28] sm:$0xff]
    %v98 = vld [vmem:[%s1 + $0x30] sm:$0xff]
    %v99 = vld [vmem:[%s1 + $0x38] sm:$0xff]
    %v100 = vld [vmem:[%s1 + $0x40] sm:$0xff]
    %v101 = vld [vmem:[%s1 + $0x48] sm:$0xff]
    %v102 = vld [vmem:[%s1 + $0x50] sm:$0xff]
    %v103 = vld [vmem:[%s1 + $0x58] sm:$0xff]
    %v104 = vld [vmem:[%s1 + $0x60] sm:$0xff]
    %v105 = vld [vmem:[%s1 + $0x68] sm:$0xff]
    %v106 = vld [vmem:[%s1 + $0x70] sm:$0xff]
    %v107 = vld [vmem:[%s1 + $0x78] sm:$0xff]
    %v108 = vld [vmem:[%s1 + $0x80] sm:$0xff]
    %v109 = vld [vmem:[%s1 + $0x88] sm:$0xff]
    %v110 = vld [vmem:[%s1 + $0x90] sm:$0xff]
    %v111 = vld [vmem:[%s1 + $0x98] sm:$0xff]
    %v112 = vld [vmem:[%s1 + $0xa0] sm:$0xff]
    %v113 = vld [vmem:[%s1 + $0xa8] sm:$0xff]
    %v114 = vld [vmem:[%s1 + $0xb0] sm:$0xff]
    %v115 = vld [vmem:[%s1 + $0xb8] sm:$0xff]
    %v116 = vld [vmem:[%s1 + $0xc0] sm:$0xff]
    %v117 = vld [vmem:[%s1 + $0xc8] sm:$0xff]
    %v118 = vld [vmem:[%s1 + $0xd0] sm:$0xff]
    %v119 = vld [vmem:[%s1 + $0xd8] sm:$0xff]
    %v120 = vld [vmem:[%s1 + $0xe0] sm:$0xff]
    %v121 = vld [vmem:[%s1 + $0xe8] sm:$0xff]
    %v122 = vld [vmem:[%s1 + $0xf0] sm:$0xff]
    %v123 = vld [vmem:[%s1 + $0xf8] sm:$0xff]
    %124 = vmatprep.subr.mxu0 %v123
    %125 = vmatpush1.msra.mxu0 %v122
    %126 = vmatprep.subr.mxu0 %v121
    %127 = vmatpush1.msra.mxu0 %v120
    %128 = vmatprep.subr.mxu0 %v119
    %129 = vmatpush1.msra.mxu0 %v118
    %130 = vmatprep.subr.mxu0 %v117
    %131 = vmatpush1.msra.mxu0 %v116
    %132 = vmatprep.subr.mxu0 %v115
    %133 = vmatpush1.msra.mxu0 %v114
    %134 = vmatprep.subr.mxu0 %v113
    %135 = vmatpush1.msra.mxu0 %v112
    %136 = vmatprep.subr.mxu0 %v111
    %137 = vmatpush1.msra.mxu0 %v110
    %138 = vmatprep.subr.mxu0 %v109
    %139 = vmatpush1.msra.mxu0 %v108
    %140 = vmatprep.subr.mxu0 %v107
    %141 = vmatpush1.msra.mxu0 %v106
    %142 = vmatprep.subr.mxu0 %v105
    %143 = vmatpush1.msra.mxu0 %v104
    %144 = vmatprep.subr.mxu0 %v103
    %145 = vmatpush1.msra.mxu0 %v102
    %146 = vmatprep.subr.mxu0 %v101
    %147 = vmatpush1.msra.mxu0 %v100
    %148 = vmatprep.subr.mxu0 %v99
    %149 = vmatpush1.msra.mxu0 %v98
    %150 = vmatprep.subr.mxu0 %v97
    %151 = vmatpush1.msra.mxu0 %v96
    %152 = vmatprep.subr.mxu0 %v95
    %153 = vmatpush1.msra.mxu0 %v94
    %154 = vmatprep.subr.mxu0 %v93
    %155 = vmatpush1.msra.mxu0 %v92
    %156 = vmatprep.subr.mxu0 0.0
    %157 = vmatpush2.msra.mxu0 0.0
    %158 = vmatprep.subr.mxu0 0.0
    %159 = vmatpush2.msra.mxu0 0.0
    %160 = vmatprep.subr.mxu0 0.0
    %161 = vmatpush2.msra.mxu0 0.0
    %162 = vmatprep.subr.mxu0 0.0
    %163 = vmatpush2.msra.mxu0 0.0
    %164 = vmatprep.subr.mxu0 0.0
    %165 = vmatpush2.msra.mxu0 0.0
    %166 = vmatprep.subr.mxu0 0.0
    %167 = vmatpush2.msra.mxu0 0.0
    %168 = vmatprep.subr.mxu0 0.0
    %169 = vmatpush2.msra.mxu0 0.0
    %170 = vmatprep.subr.mxu0 0.0
    %171 = vmatpush2.msra.mxu0 0.0
    %172 = vmatprep.subr.mxu0 0.0
    %173 = vmatpush2.msra.mxu0 0.0
    %174 = vmatprep.subr.mxu0 0.0
    %175 = vmatpush2.msra.mxu0 0.0
    %176 = vmatprep.subr.mxu0 0.0
    %177 = vmatpush2.msra.mxu0 0.0
    %178 = vmatprep.subr.mxu0 0.0
    %179 = vmatpush2.msra.mxu0 0.0
    %180 = vmatprep.subr.mxu0 0.0
    %181 = vmatpush2.msra.mxu0 0.0
    %182 = vmatprep.subr.mxu0 0.0
    %183 = vmatpush2.msra.mxu0 0.0
    %184 = vmatprep.subr.mxu0 0.0
    %185 = vmatpush2.msra.mxu0 0.0
    %186 = vmatprep.subr.mxu0 0.0
    %187 = vmatpush2.msra.mxu0 0.0
    %188 = vmatprep.mubr.f32.mxu0 0.0
    %189 = vmatmul.mubr.f32.gmra.mxu0 %v84
    %v190 = vpop.f32.mrf.mxu0
    %v191 = vadd.f32 0.0, %v190
    %v192 = vpop.f32.mrf.mxu0
    %v193 = vadd.f32 0.0, %v192
    %194 = vmatprep.mubr.f32.mxu0 0.0
    %195 = vmatmul.mubr.f32.gmra.mxu0 %v85
    %v196 = vpop.f32.mrf.mxu0
    %v197 = vadd.f32 0.0, %v196
    %v198 = vpop.f32.mrf.mxu0
    %v199 = vadd.f32 0.0, %v198
    %200 = vmatprep.mubr.f32.mxu0 0.0
    %201 = vmatmul.mubr.f32.gmra.mxu0 %v86
    %v202 = vpop.f32.mrf.mxu0
    %v203 = vadd.f32 0.0, %v202
    %v204 = vpop.f32.mrf.mxu0
    %v205 = vadd.f32 0.0, %v204
    %206 = vmatprep.mubr.f32.mxu0 0.0
    %207 = vmatmul.mubr.f32.gmra.mxu0 %v87
    %v208 = vpop.f32.mrf.mxu0
    %v209 = vadd.f32 0.0, %v208
    %v210 = vpop.f32.mrf.mxu0
    %v211 = vadd.f32 0.0, %v210
    %212 = vmatprep.mubr.f32.mxu0 0.0
    %213 = vmatmul.mubr.f32.gmra.mxu0 %v88
    %v214 = vpop.f32.mrf.mxu0
    %v215 = vadd.f32 0.0, %v214
    %v216 = vpop.f32.mrf.mxu0
    %v217 = vadd.f32 0.0, %v216
    %218 = vmatprep.mubr.f32.mxu0 0.0
    %219 = vmatmul.mubr.f32.gmra.mxu0 %v89
    %v220 = vpop.f32.mrf.mxu0
    %v221 = vadd.f32 0.0, %v220
    %v222 = vpop.f32.mrf.mxu0
    %v223 = vadd.f32 0.0, %v222
    %224 = vmatprep.mubr.f32.mxu0 0.0
    %225 = vmatmul.mubr.f32.gmra.mxu0 %v90
    %v226 = vpop.f32.mrf.mxu0
    %v227 = vadd.f32 0.0, %v226
    %v228 = vpop.f32.mrf.mxu0
    %v229 = vadd.f32 0.0, %v228
    %230 = vmatprep.mubr.f32.mxu0 0.0
    %231 = vmatmul.mubr.f32.gmra.mxu0 %v91
    %v232 = vpop.f32.mrf.mxu0
    %v233 = vadd.f32 0.0, %v232
    %v234 = vpop.f32.mrf.mxu0
    %v235 = vadd.f32 0.0, %v234
    %236 = vdwg.mxu0
    %v237 = vld [vmem:[#allocation2] sm:$0xff]
    %v238 = vld [vmem:[#allocation2 + $0x8] sm:$0xff]
    %v239 = vld [vmem:[#allocation2 + $0x10] sm:$0xff]
    %v240 = vld [vmem:[#allocation2 + $0x18] sm:$0xff]
    %v241 = vld [vmem:[#allocation2 + $0x20] sm:$0xff]
    %v242 = vld [vmem:[#allocation2 + $0x28] sm:$0xff]
    %v243 = vld [vmem:[#allocation2 + $0x30] sm:$0xff]
    %v244 = vld [vmem:[#allocation2 + $0x38] sm:$0xff]
    %v245 = vld [vmem:[#allocation2 + $0x40] sm:$0xff]
    %v246 = vld [vmem:[#allocation2 + $0x48] sm:$0xff]
    %v247 = vld [vmem:[#allocation2 + $0x50] sm:$0xff]
    %v248 = vld [vmem:[#allocation2 + $0x58] sm:$0xff]
    %v249 = vld [vmem:[#allocation2 + $0x60] sm:$0xff]
    %v250 = vld [vmem:[#allocation2 + $0x68] sm:$0xff]
    %v251 = vld [vmem:[#allocation2 + $0x70] sm:$0xff]
    %v252 = vld [vmem:[#allocation2 + $0x78] sm:$0xff]
    %v253 = vld [vmem:[#allocation2 + $0x80] sm:$0xff]
    %v254 = vld [vmem:[#allocation2 + $0x88] sm:$0xff]
    %v255 = vld [vmem:[#allocation2 + $0x90] sm:$0xff]
    %v256 = vld [vmem:[#allocation2 + $0x98] sm:$0xff]
    %v257 = vld [vmem:[#allocation2 + $0xa0] sm:$0xff]
    %v258 = vld [vmem:[#allocation2 + $0xa8] sm:$0xff]
    %v259 = vld [vmem:[#allocation2 + $0xb0] sm:$0xff]
    %v260 = vld [vmem:[#allocation2 + $0xb8] sm:$0xff]
    %v261 = vld [vmem:[#allocation2 + $0xc0] sm:$0xff]
    %v262 = vld [vmem:[#allocation2 + $0xc8] sm:$0xff]
    %v263 = vld [vmem:[#allocation2 + $0xd0] sm:$0xff]
    %v264 = vld [vmem:[#allocation2 + $0xd8] sm:$0xff]
    %v265 = vld [vmem:[#allocation2 + $0xe0] sm:$0xff]
    %v266 = vld [vmem:[#allocation2 + $0xe8] sm:$0xff]
    %v267 = vld [vmem:[#allocation2 + $0xf0] sm:$0xff]
    %v268 = vld [vmem:[#allocation2 + $0xf8] sm:$0xff]
    %v269 = vld [vmem:[#allocation2 + $0x100] sm:$0xff]
    %v270 = vld [vmem:[#allocation2 + $0x108] sm:$0xff]
    %v271 = vld [vmem:[#allocation2 + $0x110] sm:$0xff]
    %v272 = vld [vmem:[#allocation2 + $0x118] sm:$0xff]
    %v273 = vld [vmem:[#allocation2 + $0x120] sm:$0xff]
    %v274 = vld [vmem:[#allocation2 + $0x128] sm:$0xff]
    %v275 = vld [vmem:[#allocation2 + $0x130] sm:$0xff]
    %v276 = vld [vmem:[#allocation2 + $0x138] sm:$0xff]
    %v277 = vld [vmem:[#allocation2 + $0x140] sm:$0xff]
    %v278 = vld [vmem:[#allocation2 + $0x148] sm:$0xff]
    %v279 = vld [vmem:[#allocation2 + $0x150] sm:$0xff]
    %v280 = vld [vmem:[#allocation2 + $0x158] sm:$0xff]
    %v281 = vld [vmem:[#allocation2 + $0x160] sm:$0xff]
    %v282 = vld [vmem:[#allocation2 + $0x168] sm:$0xff]
    %v283 = vld [vmem:[#allocation2 + $0x170] sm:$0xff]
    %v284 = vld [vmem:[#allocation2 + $0x178] sm:$0xff]
    %v285 = vld [vmem:[#allocation2 + $0x180] sm:$0xff]
    %v286 = vld [vmem:[#allocation2 + $0x188] sm:$0xff]
    %v287 = vld [vmem:[#allocation2 + $0x190] sm:$0xff]
    %v288 = vld [vmem:[#allocation2 + $0x198] sm:$0xff]
    %v289 = vld [vmem:[#allocation2 + $0x1a0] sm:$0xff]
    %v290 = vld [vmem:[#allocation2 + $0x1a8] sm:$0xff]
    %v291 = vld [vmem:[#allocation2 + $0x1b0] sm:$0xff]
    %v292 = vld [vmem:[#allocation2 + $0x1b8] sm:$0xff]
    %v293 = vld [vmem:[#allocation2 + $0x1c0] sm:$0xff]
    %v294 = vld [vmem:[#allocation2 + $0x1c8] sm:$0xff]
    %v295 = vld [vmem:[#allocation2 + $0x1d0] sm:$0xff]
    %v296 = vld [vmem:[#allocation2 + $0x1d8] sm:$0xff]
    %v297 = vld [vmem:[#allocation2 + $0x1e0] sm:$0xff]
    %v298 = vld [vmem:[#allocation2 + $0x1e8] sm:$0xff]
    %v299 = vld [vmem:[#allocation2 + $0x1f0] sm:$0xff]
    %v300 = vld [vmem:[#allocation2 + $0x1f8] sm:$0xff]
    %301 = vmatprep.subr.mxu0 %v268
    %302 = vmatpush1.msra.mxu0 %v267
    %303 = vmatprep.subr.mxu0 %v266
    %304 = vmatpush1.msra.mxu0 %v265
    %305 = vmatprep.subr.mxu0 %v264
    %306 = vmatpush1.msra.mxu0 %v263
    %307 = vmatprep.subr.mxu0 %v262
    %308 = vmatpush1.msra.mxu0 %v261
    %309 = vmatprep.subr.mxu0 %v260
    %310 = vmatpush1.msra.mxu0 %v259
    %311 = vmatprep.subr.mxu0 %v258
    %312 = vmatpush1.msra.mxu0 %v257
    %313 = vmatprep.subr.mxu0 %v256
    %314 = vmatpush1.msra.mxu0 %v255
    %315 = vmatprep.subr.mxu0 %v254
    %316 = vmatpush1.msra.mxu0 %v253
    %317 = vmatprep.subr.mxu0 %v252
    %318 = vmatpush1.msra.mxu0 %v251
    %319 = vmatprep.subr.mxu0 %v250
    %320 = vmatpush1.msra.mxu0 %v249
    %321 = vmatprep.subr.mxu0 %v248
    %322 = vmatpush1.msra.mxu0 %v247
    %323 = vmatprep.subr.mxu0 %v246
    %324 = vmatpush1.msra.mxu0 %v245
    %325 = vmatprep.subr.mxu0 %v244
    %326 = vmatpush1.msra.mxu0 %v243
    %327 = vmatprep.subr.mxu0 %v242
    %328 = vmatpush1.msra.mxu0 %v241
    %329 = vmatprep.subr.mxu0 %v240
    %330 = vmatpush1.msra.mxu0 %v239
    %331 = vmatprep.subr.mxu0 %v238
    %332 = vmatpush1.msra.mxu0 %v237
    %333 = vmatprep.subr.mxu0 %v300
    %334 = vmatpush2.msra.mxu0 %v299
    %335 = vmatprep.subr.mxu0 %v298
    %336 = vmatpush2.msra.mxu0 %v297
    %337 = vmatprep.subr.mxu0 %v296
    %338 = vmatpush2.msra.mxu0 %v295
    %339 = vmatprep.subr.mxu0 %v294
    %340 = vmatpush2.msra.mxu0 %v293
    %341 = vmatprep.subr.mxu0 %v292
    %342 = vmatpush2.msra.mxu0 %v291
    %343 = vmatprep.subr.mxu0 %v290
    %344 = vmatpush2.msra.mxu0 %v289
    %345 = vmatprep.subr.mxu0 %v288
    %346 = vmatpush2.msra.mxu0 %v287
    %347 = vmatprep.subr.mxu0 %v286
    %348 = vmatpush2.msra.mxu0 %v285
    %349 = vmatprep.subr.mxu0 %v284
    %350 = vmatpush2.msra.mxu0 %v283
    %351 = vmatprep.subr.mxu0 %v282
    %352 = vmatpush2.msra.mxu0 %v281
    %353 = vmatprep.subr.mxu0 %v280
    %354 = vmatpush2.msra.mxu0 %v279
    %355 = vmatprep.subr.mxu0 %v278
    %356 = vmatpush2.msra.mxu0 %v277
    %357 = vmatprep.subr.mxu0 %v276
    %358 = vmatpush2.msra.mxu0 %v275
    %359 = vmatprep.subr.mxu0 %v274
    %360 = vmatpush2.msra.mxu0 %v273
    %361 = vmatprep.subr.mxu0 %v272
    %362 = vmatpush2.msra.mxu0 %v271
    %363 = vmatprep.subr.mxu0 %v270
    %364 = vmatpush2.msra.mxu0 %v269
    %365 = vmatprep.mubr.f32.mxu0 0.0
    %366 = vmatmul.mubr.f32.gmra.mxu0 0.0
    %v367 = vpop.f32.mrf.mxu0
    %v368 = vadd.f32 0.0, %v367
    %v369 = vpop.f32.mrf.mxu0
    %v370 = vadd.f32 0.0, %v369
    %371 = vdwg.mxu0
    %v372 = vadd.f32 %v191, %v368
    %v373 = vadd.f32 %v193, %v370
    %v374 = vtanh.pop %v372
    %v375 = vtanh.pop %v373
    %376 = vmatprep.subr.mxu0 %v268
    %377 = vmatpush1.msra.mxu0 %v267
    %378 = vmatprep.subr.mxu0 %v266
    %379 = vmatpush1.msra.mxu0 %v265
    %380 = vmatprep.subr.mxu0 %v264
    %381 = vmatpush1.msra.mxu0 %v263
    %382 = vmatprep.subr.mxu0 %v262
    %383 = vmatpush1.msra.mxu0 %v261
    %384 = vmatprep.subr.mxu0 %v260
    %385 = vmatpush1.msra.mxu0 %v259
    %386 = vmatprep.subr.mxu0 %v258
    %387 = vmatpush1.msra.mxu0 %v257
    %388 = vmatprep.subr.mxu0 %v256
    %389 = vmatpush1.msra.mxu0 %v255
    %390 = vmatprep.subr.mxu0 %v254
    %391 = vmatpush1.msra.mxu0 %v253
    %392 = vmatprep.subr.mxu0 %v252
    %393 = vmatpush1.msra.mxu0 %v251
    %394 = vmatprep.subr.mxu0 %v250
    %395 = vmatpush1.msra.mxu0 %v249
    %396 = vmatprep.subr.mxu0 %v248
    %397 = vmatpush1.msra.mxu0 %v247
    %398 = vmatprep.subr.mxu0 %v246
    %399 = vmatpush1.msra.mxu0 %v245
    %400 = vmatprep.subr.mxu0 %v244
    %401 = vmatpush1.msra.mxu0 %v243
    %402 = vmatprep.subr.mxu0 %v242
    %403 = vmatpush1.msra.mxu0 %v241
    %404 = vmatprep.subr.mxu0 %v240
    %405 = vmatpush1.msra.mxu0 %v239
    %406 = vmatprep.subr.mxu0 %v238
    %407 = vmatpush1.msra.mxu0 %v237
    %408 = vmatprep.subr.mxu0 %v300
    %409 = vmatpush2.msra.mxu0 %v299
    %410 = vmatprep.subr.mxu0 %v298
    %411 = vmatpush2.msra.mxu0 %v297
    %412 = vmatprep.subr.mxu0 %v296
    %413 = vmatpush2.msra.mxu0 %v295
    %414 = vmatprep.subr.mxu0 %v294
    %415 = vmatpush2.msra.mxu0 %v293
    %416 = vmatprep.subr.mxu0 %v292
    %417 = vmatpush2.msra.mxu0 %v291
    %418 = vmatprep.subr.mxu0 %v290
    %419 = vmatpush2.msra.mxu0 %v289
    %420 = vmatprep.subr.mxu0 %v288
    %421 = vmatpush2.msra.mxu0 %v287
    %422 = vmatprep.subr.mxu0 %v286
    %423 = vmatpush2.msra.mxu0 %v285
    %424 = vmatprep.subr.mxu0 %v284
    %425 = vmatpush2.msra.mxu0 %v283
    %426 = vmatprep.subr.mxu0 %v282
    %427 = vmatpush2.msra.mxu0 %v281
    %428 = vmatprep.subr.mxu0 %v280
    %429 = vmatpush2.msra.mxu0 %v279
    %430 = vmatprep.subr.mxu0 %v278
    %431 = vmatpush2.msra.mxu0 %v277
    %432 = vmatprep.subr.mxu0 %v276
    %433 = vmatpush2.msra.mxu0 %v275
    %434 = vmatprep.subr.mxu0 %v274
    %435 = vmatpush2.msra.mxu0 %v273
    %436 = vmatprep.subr.mxu0 %v272
    %437 = vmatpush2.msra.mxu0 %v271
    %438 = vmatprep.subr.mxu0 %v270
    %439 = vmatpush2.msra.mxu0 %v269
    %440 = vmatprep.mubr.f32.mxu0 %v375
    %441 = vmatmul.mubr.f32.gmra.mxu0 %v374
    %v442 = vpop.f32.mrf.mxu0
    %v443 = vadd.f32 0.0, %v442
    %v444 = vpop.f32.mrf.mxu0
    %v445 = vadd.f32 0.0, %v444
    %446 = vdwg.mxu0
    %v447 = vadd.f32 %v197, %v443
    %v448 = vadd.f32 %v199, %v445
    %v449 = vtanh.pop %v447
    %v450 = vtanh.pop %v448
    %451 = vmatprep.subr.mxu0 %v268
    %452 = vmatpush1.msra.mxu0 %v267
    %453 = vmatprep.subr.mxu0 %v266
    %454 = vmatpush1.msra.mxu0 %v265
    %455 = vmatprep.subr.mxu0 %v264
    %456 = vmatpush1.msra.mxu0 %v263
    %457 = vmatprep.subr.mxu0 %v262
    %458 = vmatpush1.msra.mxu0 %v261
    %459 = vmatprep.subr.mxu0 %v260
    %460 = vmatpush1.msra.mxu0 %v259
    %461 = vmatprep.subr.mxu0 %v258
    %462 = vmatpush1.msra.mxu0 %v257
    %463 = vmatprep.subr.mxu0 %v256
    %464 = vmatpush1.msra.mxu0 %v255
    %465 = vmatprep.subr.mxu0 %v254
    %466 = vmatpush1.msra.mxu0 %v253
    %467 = vmatprep.subr.mxu0 %v252
    %468 = vmatpush1.msra.mxu0 %v251
    %469 = vmatprep.subr.mxu0 %v250
    %470 = vmatpush1.msra.mxu0 %v249
    %471 = vmatprep.subr.mxu0 %v248
    %472 = vmatpush1.msra.mxu0 %v247
    %473 = vmatprep.subr.mxu0 %v246
    %474 = vmatpush1.msra.mxu0 %v245
    %475 = vmatprep.subr.mxu0 %v244
    %476 = vmatpush1.msra.mxu0 %v243
    %477 = vmatprep.subr.mxu0 %v242
    %478 = vmatpush1.msra.mxu0 %v241
    %479 = vmatprep.subr.mxu0 %v240
    %480 = vmatpush1.msra.mxu0 %v239
    %481 = vmatprep.subr.mxu0 %v238
    %482 = vmatpush1.msra.mxu0 %v237
    %483 = vmatprep.subr.mxu0 %v300
    %484 = vmatpush2.msra.mxu0 %v299
    %485 = vmatprep.subr.mxu0 %v298
    %486 = vmatpush2.msra.mxu0 %v297
    %487 = vmatprep.subr.mxu0 %v296
    %488 = vmatpush2.msra.mxu0 %v295
    %489 = vmatprep.subr.mxu0 %v294
    %490 = vmatpush2.msra.mxu0 %v293
    %491 = vmatprep.subr.mxu0 %v292
    %492 = vmatpush2.msra.mxu0 %v291
    %493 = vmatprep.subr.mxu0 %v290
    %494 = vmatpush2.msra.mxu0 %v289
    %495 = vmatprep.subr.mxu0 %v288
    %496 = vmatpush2.msra.mxu0 %v287
    %497 = vmatprep.subr.mxu0 %v286
    %498 = vmatpush2.msra.mxu0 %v285
    %499 = vmatprep.subr.mxu0 %v284
    %500 = vmatpush2.msra.mxu0 %v283
    %501 = vmatprep.subr.mxu0 %v282
    %502 = vmatpush2.msra.mxu0 %v281
    %503 = vmatprep.subr.mxu0 %v280
    %504 = vmatpush2.msra.mxu0 %v279
    %505 = vmatprep.subr.mxu0 %v278
    %506 = vmatpush2.msra.mxu0 %v277
    %507 = vmatprep.subr.mxu0 %v276
    %508 = vmatpush2.msra.mxu0 %v275
    %509 = vmatprep.subr.mxu0 %v274
    %510 = vmatpush2.msra.mxu0 %v273
    %511 = vmatprep.subr.mxu0 %v272
    %512 = vmatpush2.msra.mxu0 %v271
    %513 = vmatprep.subr.mxu0 %v270
    %514 = vmatpush2.msra.mxu0 %v269
    %515 = vmatprep.mubr.f32.mxu0 %v450
    %516 = vmatmul.mubr.f32.gmra.mxu0 %v449
    %v517 = vpop.f32.mrf.mxu0
    %v518 = vadd.f32 0.0, %v517
    %v519 = vpop.f32.mrf.mxu0
    %v520 = vadd.f32 0.0, %v519
    %521 = vdwg.mxu0
    %v522 = vadd.f32 %v203, %v518
    %v523 = vadd.f32 %v205, %v520
    %v524 = vtanh.pop %v522
    %v525 = vtanh.pop %v523
    %526 = vmatprep.subr.mxu0 %v268
    %527 = vmatpush1.msra.mxu0 %v267
    %528 = vmatprep.subr.mxu0 %v266
    %529 = vmatpush1.msra.mxu0 %v265
    %530 = vmatprep.subr.mxu0 %v264
    %531 = vmatpush1.msra.mxu0 %v263
    %532 = vmatprep.subr.mxu0 %v262
    %533 = vmatpush1.msra.mxu0 %v261
    %534 = vmatprep.subr.mxu0 %v260
    %535 = vmatpush1.msra.mxu0 %v259
    %536 = vmatprep.subr.mxu0 %v258
    %537 = vmatpush1.msra.mxu0 %v257
    %538 = vmatprep.subr.mxu0 %v256
    %539 = vmatpush1.msra.mxu0 %v255
    %540 = vmatprep.subr.mxu0 %v254
    %541 = vmatpush1.msra.mxu0 %v253
    %542 = vmatprep.subr.mxu0 %v252
    %543 = vmatpush1.msra.mxu0 %v251
    %544 = vmatprep.subr.mxu0 %v250
    %545 = vmatpush1.msra.mxu0 %v249
    %546 = vmatprep.subr.mxu0 %v248
    %547 = vmatpush1.msra.mxu0 %v247
    %548 = vmatprep.subr.mxu0 %v246
    %549 = vmatpush1.msra.mxu0 %v245
    %550 = vmatprep.subr.mxu0 %v244
    %551 = vmatpush1.msra.mxu0 %v243
    %552 = vmatprep.subr.mxu0 %v242
    %553 = vmatpush1.msra.mxu0 %v241
    %554 = vmatprep.subr.mxu0 %v240
    %555 = vmatpush1.msra.mxu0 %v239
    %556 = vmatprep.subr.mxu0 %v238
    %557 = vmatpush1.msra.mxu0 %v237
    %558 = vmatprep.subr.mxu0 %v300
    %559 = vmatpush2.msra.mxu0 %v299
    %560 = vmatprep.subr.mxu0 %v298
    %561 = vmatpush2.msra.mxu0 %v297
    %562 = vmatprep.subr.mxu0 %v296
    %563 = vmatpush2.msra.mxu0 %v295
    %564 = vmatprep.subr.mxu0 %v294
    %565 = vmatpush2.msra.mxu0 %v293
    %566 = vmatprep.subr.mxu0 %v292
    %567 = vmatpush2.msra.mxu0 %v291
    %568 = vmatprep.subr.mxu0 %v290
    %569 = vmatpush2.msra.mxu0 %v289
    %570 = vmatprep.subr.mxu0 %v288
    %571 = vmatpush2.msra.mxu0 %v287
    %572 = vmatprep.subr.mxu0 %v286
    %573 = vmatpush2.msra.mxu0 %v285
    %574 = vmatprep.subr.mxu0 %v284
    %575 = vmatpush2.msra.mxu0 %v283
    %576 = vmatprep.subr.mxu0 %v282
    %577 = vmatpush2.msra.mxu0 %v281
    %578 = vmatprep.subr.mxu0 %v280
    %579 = vmatpush2.msra.mxu0 %v279
    %580 = vmatprep.subr.mxu0 %v278
    %581 = vmatpush2.msra.mxu0 %v277
    %582 = vmatprep.subr.mxu0 %v276
    %583 = vmatpush2.msra.mxu0 %v275
    %584 = vmatprep.subr.mxu0 %v274
    %585 = vmatpush2.msra.mxu0 %v273
    %586 = vmatprep.subr.mxu0 %v272
    %587 = vmatpush2.msra.mxu0 %v271
    %588 = vmatprep.subr.mxu0 %v270
    %589 = vmatpush2.msra.mxu0 %v269
    %590 = vmatprep.mubr.f32.mxu0 %v525
    %591 = vmatmul.mubr.f32.gmra.mxu0 %v524
    %v592 = vpop.f32.mrf.mxu0
    %v593 = vadd.f32 0.0, %v592
    %v594 = vpop.f32.mrf.mxu0
    %v595 = vadd.f32 0.0, %v594
    %596 = vdwg.mxu0
    %v597 = vadd.f32 %v209, %v593
    %v598 = vadd.f32 %v211, %v595
    %v599 = vtanh.pop %v597
    %v600 = vtanh.pop %v598
    %601 = vmatprep.subr.mxu0 %v268
    %602 = vmatpush1.msra.mxu0 %v267
    %603 = vmatprep.subr.mxu0 %v266
    %604 = vmatpush1.msra.mxu0 %v265
    %605 = vmatprep.subr.mxu0 %v264
    %606 = vmatpush1.msra.mxu0 %v263
    %607 = vmatprep.subr.mxu0 %v262
    %608 = vmatpush1.msra.mxu0 %v261
    %609 = vmatprep.subr.mxu0 %v260
    %610 = vmatpush1.msra.mxu0 %v259
    %611 = vmatprep.subr.mxu0 %v258
    %612 = vmatpush1.msra.mxu0 %v257
    %613 = vmatprep.subr.mxu0 %v256
    %614 = vmatpush1.msra.mxu0 %v255
    %615 = vmatprep.subr.mxu0 %v254
    %616 = vmatpush1.msra.mxu0 %v253
    %617 = vmatprep.subr.mxu0 %v252
    %618 = vmatpush1.msra.mxu0 %v251
    %619 = vmatprep.subr.mxu0 %v250
    %620 = vmatpush1.msra.mxu0 %v249
    %621 = vmatprep.subr.mxu0 %v248
    %622 = vmatpush1.msra.mxu0 %v247
    %623 = vmatprep.subr.mxu0 %v246
    %624 = vmatpush1.msra.mxu0 %v245
    %625 = vmatprep.subr.mxu0 %v244
    %626 = vmatpush1.msra.mxu0 %v243
    %627 = vmatprep.subr.mxu0 %v242
    %628 = vmatpush1.msra.mxu0 %v241
    %629 = vmatprep.subr.mxu0 %v240
    %630 = vmatpush1.msra.mxu0 %v239
    %631 = vmatprep.subr.mxu0 %v238
    %632 = vmatpush1.msra.mxu0 %v237
    %633 = vmatprep.subr.mxu0 %v300
    %634 = vmatpush2.msra.mxu0 %v299
    %635 = vmatprep.subr.mxu0 %v298
    %636 = vmatpush2.msra.mxu0 %v297
    %637 = vmatprep.subr.mxu0 %v296
    %638 = vmatpush2.msra.mxu0 %v295
    %639 = vmatprep.subr.mxu0 %v294
    %640 = vmatpush2.msra.mxu0 %v293
    %641 = vmatprep.subr.mxu0 %v292
    %642 = vmatpush2.msra.mxu0 %v291
    %643 = vmatprep.subr.mxu0 %v290
    %644 = vmatpush2.msra.mxu0 %v289
    %645 = vmatprep.subr.mxu0 %v288
    %646 = vmatpush2.msra.mxu0 %v287
    %647 = vmatprep.subr.mxu0 %v286
    %648 = vmatpush2.msra.mxu0 %v285
    %649 = vmatprep.subr.mxu0 %v284
    %650 = vmatpush2.msra.mxu0 %v283
    %651 = vmatprep.subr.mxu0 %v282
    %652 = vmatpush2.msra.mxu0 %v281
    %653 = vmatprep.subr.mxu0 %v280
    %654 = vmatpush2.msra.mxu0 %v279
    %655 = vmatprep.subr.mxu0 %v278
    %656 = vmatpush2.msra.mxu0 %v277
    %657 = vmatprep.subr.mxu0 %v276
    %658 = vmatpush2.msra.mxu0 %v275
    %659 = vmatprep.subr.mxu0 %v274
    %660 = vmatpush2.msra.mxu0 %v273
    %661 = vmatprep.subr.mxu0 %v272
    %662 = vmatpush2.msra.mxu0 %v271
    %663 = vmatprep.subr.mxu0 %v270
    %664 = vmatpush2.msra.mxu0 %v269
    %665 = vmatprep.mubr.f32.mxu0 %v600
    %666 = vmatmul.mubr.f32.gmra.mxu0 %v599
    %v667 = vpop.f32.mrf.mxu0
    %v668 = vadd.f32 0.0, %v667
    %v669 = vpop.f32.mrf.mxu0
    %v670 = vadd.f32 0.0, %v669
    %671 = vdwg.mxu0
    %v672 = vadd.f32 %v215, %v668
    %v673 = vadd.f32 %v217, %v670
    %v674 = vtanh.pop %v672
    %v675 = vtanh.pop %v673
    %676 = vmatprep.subr.mxu0 %v268
    %677 = vmatpush1.msra.mxu0 %v267
    %678 = vmatprep.subr.mxu0 %v266
    %679 = vmatpush1.msra.mxu0 %v265
    %680 = vmatprep.subr.mxu0 %v264
    %681 = vmatpush1.msra.mxu0 %v263
    %682 = vmatprep.subr.mxu0 %v262
    %683 = vmatpush1.msra.mxu0 %v261
    %684 = vmatprep.subr.mxu0 %v260
    %685 = vmatpush1.msra.mxu0 %v259
    %686 = vmatprep.subr.mxu0 %v258
    %687 = vmatpush1.msra.mxu0 %v257
    %688 = vmatprep.subr.mxu0 %v256
    %689 = vmatpush1.msra.mxu0 %v255
    %690 = vmatprep.subr.mxu0 %v254
    %691 = vmatpush1.msra.mxu0 %v253
    %692 = vmatprep.subr.mxu0 %v252
    %693 = vmatpush1.msra.mxu0 %v251
    %694 = vmatprep.subr.mxu0 %v250
    %695 = vmatpush1.msra.mxu0 %v249
    %696 = vmatprep.subr.mxu0 %v248
    %697 = vmatpush1.msra.mxu0 %v247
    %698 = vmatprep.subr.mxu0 %v246
    %699 = vmatpush1.msra.mxu0 %v245
    %700 = vmatprep.subr.mxu0 %v244
    %701 = vmatpush1.msra.mxu0 %v243
    %702 = vmatprep.subr.mxu0 %v242
    %703 = vmatpush1.msra.mxu0 %v241
    %704 = vmatprep.subr.mxu0 %v240
    %705 = vmatpush1.msra.mxu0 %v239
    %706 = vmatprep.subr.mxu0 %v238
    %707 = vmatpush1.msra.mxu0 %v237
    %708 = vmatprep.subr.mxu0 %v300
    %709 = vmatpush2.msra.mxu0 %v299
    %710 = vmatprep.subr.mxu0 %v298
    %711 = vmatpush2.msra.mxu0 %v297
    %712 = vmatprep.subr.mxu0 %v296
    %713 = vmatpush2.msra.mxu0 %v295
    %714 = vmatprep.subr.mxu0 %v294
    %715 = vmatpush2.msra.mxu0 %v293
    %716 = vmatprep.subr.mxu0 %v292
    %717 = vmatpush2.msra.mxu0 %v291
    %718 = vmatprep.subr.mxu0 %v290
    %719 = vmatpush2.msra.mxu0 %v289
    %720 = vmatprep.subr.mxu0 %v288
    %721 = vmatpush2.msra.mxu0 %v287
    %722 = vmatprep.subr.mxu0 %v286
    %723 = vmatpush2.msra.mxu0 %v285
    %724 = vmatprep.subr.mxu0 %v284
    %725 = vmatpush2.msra.mxu0 %v283
    %726 = vmatprep.subr.mxu0 %v282
    %727 = vmatpush2.msra.mxu0 %v281
    %728 = vmatprep.subr.mxu0 %v280
    %729 = vmatpush2.msra.mxu0 %v279
    %730 = vmatprep.subr.mxu0 %v278
    %731 = vmatpush2.msra.mxu0 %v277
    %732 = vmatprep.subr.mxu0 %v276
    %733 = vmatpush2.msra.mxu0 %v275
    %734 = vmatprep.subr.mxu0 %v274
    %735 = vmatpush2.msra.mxu0 %v273
    %736 = vmatprep.subr.mxu0 %v272
    %737 = vmatpush2.msra.mxu0 %v271
    %738 = vmatprep.subr.mxu0 %v270
    %739 = vmatpush2.msra.mxu0 %v269
    %740 = vmatprep.mubr.f32.mxu0 %v675
    %741 = vmatmul.mubr.f32.gmra.mxu0 %v674
    %v742 = vpop.f32.mrf.mxu0
    %v743 = vadd.f32 0.0, %v742
    %v744 = vpop.f32.mrf.mxu0
    %v745 = vadd.f32 0.0, %v744
    %746 = vdwg.mxu0
    %v747 = vadd.f32 %v221, %v743
    %v748 = vadd.f32 %v223, %v745
    %v749 = vtanh.pop %v747
    %v750 = vtanh.pop %v748
    %751 = vmatprep.subr.mxu0 %v268
    %752 = vmatpush1.msra.mxu0 %v267
    %753 = vmatprep.subr.mxu0 %v266
    %754 = vmatpush1.msra.mxu0 %v265
    %755 = vmatprep.subr.mxu0 %v264
    %756 = vmatpush1.msra.mxu0 %v263
    %757 = vmatprep.subr.mxu0 %v262
    %758 = vmatpush1.msra.mxu0 %v261
    %759 = vmatprep.subr.mxu0 %v260
    %760 = vmatpush1.msra.mxu0 %v259
    %761 = vmatprep.subr.mxu0 %v258
    %762 = vmatpush1.msra.mxu0 %v257
    %763 = vmatprep.subr.mxu0 %v256
    %764 = vmatpush1.msra.mxu0 %v255
    %765 = vmatprep.subr.mxu0 %v254
    %766 = vmatpush1.msra.mxu0 %v253
    %767 = vmatprep.subr.mxu0 %v252
    %768 = vmatpush1.msra.mxu0 %v251
    %769 = vmatprep.subr.mxu0 %v250
    %770 = vmatpush1.msra.mxu0 %v249
    %771 = vmatprep.subr.mxu0 %v248
    %772 = vmatpush1.msra.mxu0 %v247
    %773 = vmatprep.subr.mxu0 %v246
    %774 = vmatpush1.msra.mxu0 %v245
    %775 = vmatprep.subr.mxu0 %v244
    %776 = vmatpush1.msra.mxu0 %v243
    %777 = vmatprep.subr.mxu0 %v242
    %778 = vmatpush1.msra.mxu0 %v241
    %779 = vmatprep.subr.mxu0 %v240
    %780 = vmatpush1.msra.mxu0 %v239
    %781 = vmatprep.subr.mxu0 %v238
    %782 = vmatpush1.msra.mxu0 %v237
    %783 = vmatprep.subr.mxu0 %v300
    %784 = vmatpush2.msra.mxu0 %v299
    %785 = vmatprep.subr.mxu0 %v298
    %786 = vmatpush2.msra.mxu0 %v297
    %787 = vmatprep.subr.mxu0 %v296
    %788 = vmatpush2.msra.mxu0 %v295
    %789 = vmatprep.subr.mxu0 %v294
    %790 = vmatpush2.msra.mxu0 %v293
    %791 = vmatprep.subr.mxu0 %v292
    %792 = vmatpush2.msra.mxu0 %v291
    %793 = vmatprep.subr.mxu0 %v290
    %794 = vmatpush2.msra.mxu0 %v289
    %795 = vmatprep.subr.mxu0 %v288
    %796 = vmatpush2.msra.mxu0 %v287
    %797 = vmatprep.subr.mxu0 %v286
    %798 = vmatpush2.msra.mxu0 %v285
    %799 = vmatprep.subr.mxu0 %v284
    %800 = vmatpush2.msra.mxu0 %v283
    %801 = vmatprep.subr.mxu0 %v282
    %802 = vmatpush2.msra.mxu0 %v281
    %803 = vmatprep.subr.mxu0 %v280
    %804 = vmatpush2.msra.mxu0 %v279
    %805 = vmatprep.subr.mxu0 %v278
    %806 = vmatpush2.msra.mxu0 %v277
    %807 = vmatprep.subr.mxu0 %v276
    %808 = vmatpush2.msra.mxu0 %v275
    %809 = vmatprep.subr.mxu0 %v274
    %810 = vmatpush2.msra.mxu0 %v273
    %811 = vmatprep.subr.mxu0 %v272
    %812 = vmatpush2.msra.mxu0 %v271
    %813 = vmatprep.subr.mxu0 %v270
    %814 = vmatpush2.msra.mxu0 %v269
    %815 = vmatprep.mubr.f32.mxu0 %v750
    %816 = vmatmul.mubr.f32.gmra.mxu0 %v749
    %v817 = vpop.f32.mrf.mxu0
    %v818 = vadd.f32 0.0, %v817
    %v819 = vpop.f32.mrf.mxu0
    %v820 = vadd.f32 0.0, %v819
    %821 = vdwg.mxu0
    %v822 = vadd.f32 %v227, %v818
    %v823 = vadd.f32 %v229, %v820
    %v824 = vtanh.pop %v822
    %v825 = vtanh.pop %v823
    %826 = vmatprep.subr.mxu0 %v268
    %827 = vmatpush1.msra.mxu0 %v267
    %828 = vmatprep.subr.mxu0 %v266
    %829 = vmatpush1.msra.mxu0 %v265
    %830 = vmatprep.subr.mxu0 %v264
    %831 = vmatpush1.msra.mxu0 %v263
    %832 = vmatprep.subr.mxu0 %v262
    %833 = vmatpush1.msra.mxu0 %v261
    %834 = vmatprep.subr.mxu0 %v260
    %835 = vmatpush1.msra.mxu0 %v259
    %836 = vmatprep.subr.mxu0 %v258
    %837 = vmatpush1.msra.mxu0 %v257
    %838 = vmatprep.subr.mxu0 %v256
    %839 = vmatpush1.msra.mxu0 %v255
    %840 = vmatprep.subr.mxu0 %v254
    %841 = vmatpush1.msra.mxu0 %v253
    %842 = vmatprep.subr.mxu0 %v252
    %843 = vmatpush1.msra.mxu0 %v251
    %844 = vmatprep.subr.mxu0 %v250
    %845 = vmatpush1.msra.mxu0 %v249
    %846 = vmatprep.subr.mxu0 %v248
    %847 = vmatpush1.msra.mxu0 %v247
    %848 = vmatprep.subr.mxu0 %v246
    %849 = vmatpush1.msra.mxu0 %v245
    %850 = vmatprep.subr.mxu0 %v244
    %851 = vmatpush1.msra.mxu0 %v243
    %852 = vmatprep.subr.mxu0 %v242
    %853 = vmatpush1.msra.mxu0 %v241
    %854 = vmatprep.subr.mxu0 %v240
    %855 = vmatpush1.msra.mxu0 %v239
    %856 = vmatprep.subr.mxu0 %v238
    %857 = vmatpush1.msra.mxu0 %v237
    %858 = vmatprep.subr.mxu0 %v300
    %859 = vmatpush2.msra.mxu0 %v299
    %860 = vmatprep.subr.mxu0 %v298
    %861 = vmatpush2.msra.mxu0 %v297
    %862 = vmatprep.subr.mxu0 %v296
    %863 = vmatpush2.msra.mxu0 %v295
    %864 = vmatprep.subr.mxu0 %v294
    %865 = vmatpush2.msra.mxu0 %v293
    %866 = vmatprep.subr.mxu0 %v292
    %867 = vmatpush2.msra.mxu0 %v291
    %868 = vmatprep.subr.mxu0 %v290
    %869 = vmatpush2.msra.mxu0 %v289
    %870 = vmatprep.subr.mxu0 %v288
    %871 = vmatpush2.msra.mxu0 %v287
    %872 = vmatprep.subr.mxu0 %v286
    %873 = vmatpush2.msra.mxu0 %v285
    %874 = vmatprep.subr.mxu0 %v284
    %875 = vmatpush2.msra.mxu0 %v283
    %876 = vmatprep.subr.mxu0 %v282
    %877 = vmatpush2.msra.mxu0 %v281
    %878 = vmatprep.subr.mxu0 %v280
    %879 = vmatpush2.msra.mxu0 %v279
    %880 = vmatprep.subr.mxu0 %v278
    %881 = vmatpush2.msra.mxu0 %v277
    %882 = vmatprep.subr.mxu0 %v276
    %883 = vmatpush2.msra.mxu0 %v275
    %884 = vmatprep.subr.mxu0 %v274
    %885 = vmatpush2.msra.mxu0 %v273
    %886 = vmatprep.subr.mxu0 %v272
    %887 = vmatpush2.msra.mxu0 %v271
    %888 = vmatprep.subr.mxu0 %v270
    %889 = vmatpush2.msra.mxu0 %v269
    %890 = vmatprep.mubr.f32.mxu0 %v825
    %891 = vmatmul.mubr.f32.gmra.mxu0 %v824
    %v892 = vpop.f32.mrf.mxu0
    %v893 = vadd.f32 0.0, %v892
    %v894 = vpop.f32.mrf.mxu0
    %v895 = vadd.f32 0.0, %v894
    %896 = vdwg.mxu0
    %v897 = vadd.f32 %v233, %v893
    %v898 = vadd.f32 %v235, %v895
    %v899 = vtanh.pop %v897
    %v900 = vtanh.pop %v898
    %v901 = vld [vmem:[%s4] sm:$0x1]
    %v902 = vld [vmem:[%s4 + $0x1] sm:$0x1]
    %v903 = vld [vmem:[%s4 + $0x2] sm:$0x1]
    %v904 = vld [vmem:[%s3] sm:$0xff]
    %v905 = vld [vmem:[%s3 + $0x8] sm:$0xff]
    %v906 = vld [vmem:[%s3 + $0x10] sm:$0xff]
    %v907 = vld [vmem:[%s3 + $0x18] sm:$0xff]
    %v908 = vld [vmem:[%s3 + $0x20] sm:$0xff]
    %v909 = vld [vmem:[%s3 + $0x28] sm:$0xff]
    %v910 = vld [vmem:[%s3 + $0x30] sm:$0xff]
    %v911 = vld [vmem:[%s3 + $0x38] sm:$0xff]
    %v912 = vld [vmem:[%s3 + $0x40] sm:$0xff]
    %v913 = vld [vmem:[%s3 + $0x48] sm:$0xff]
    %v914 = vld [vmem:[%s3 + $0x50] sm:$0xff]
    %v915 = vld [vmem:[%s3 + $0x58] sm:$0xff]
    %v916 = vld [vmem:[%s3 + $0x60] sm:$0xff]
    %v917 = vld [vmem:[%s3 + $0x68] sm:$0xff]
    %v918 = vld [vmem:[%s3 + $0x70] sm:$0xff]
    %v919 = vld [vmem:[%s3 + $0x78] sm:$0xff]
    %v920 = vld [vmem:[%s3 + $0x80] sm:$0xff]
    %v921 = vld [vmem:[%s3 + $0x88] sm:$0xff]
    %v922 = vld [vmem:[%s3 + $0x90] sm:$0xff]
    %v923 = vld [vmem:[%s3 + $0x98] sm:$0xff]
    %v924 = vld [vmem:[%s3 + $0xa0] sm:$0xff]
    %v925 = vld [vmem:[%s3 + $0xa8] sm:$0xff]
    %v926 = vld [vmem:[%s3 + $0xb0] sm:$0xff]
    %v927 = vld [vmem:[%s3 + $0xb8] sm:$0xff]
    %v928 = vld [vmem:[%s3 + $0xc0] sm:$0xff]
    %v929 = vld [vmem:[%s3 + $0xc8] sm:$0xff]
    %v930 = vld [vmem:[%s3 + $0xd0] sm:$0xff]
    %v931 = vld [vmem:[%s3 + $0xd8] sm:$0xff]
    %v932 = vld [vmem:[%s3 + $0xe0] sm:$0xff]
    %v933 = vld [vmem:[%s3 + $0xe8] sm:$0xff]
    %v934 = vld [vmem:[%s3 + $0xf0] sm:$0xff]
    %v935 = vld [vmem:[%s3 + $0xf8] sm:$0xff]
    %v936 = vlaneseq
    %v937 = vshrl.u32 %v936, 7
    %v938 = vsub.s32 0, %v937
    %v939 = vrot.slane %v901, %v938
    %940 = vmatprep.subr.mxu0 0.0
    %941 = vmatpush1.msra.mxu0 %v919
    %942 = vmatprep.subr.mxu0 0.0
    %943 = vmatpush1.msra.mxu0 %v918
    %944 = vmatprep.subr.mxu0 0.0
    %945 = vmatpush1.msra.mxu0 %v917
    %946 = vmatprep.subr.mxu0 0.0
    %947 = vmatpush1.msra.mxu0 %v916
    %948 = vmatprep.subr.mxu0 0.0
    %949 = vmatpush1.msra.mxu0 %v915
    %950 = vmatprep.subr.mxu0 0.0
    %951 = vmatpush1.msra.mxu0 %v914
    %952 = vmatprep.subr.mxu0 0.0
    %953 = vmatpush1.msra.mxu0 %v913
    %954 = vmatprep.subr.mxu0 0.0
    %955 = vmatpush1.msra.mxu0 %v912
    %956 = vmatprep.subr.mxu0 0.0
    %957 = vmatpush1.msra.mxu0 %v911
    %958 = vmatprep.subr.mxu0 0.0
    %959 = vmatpush1.msra.mxu0 %v910
    %960 = vmatprep.subr.mxu0 0.0
    %961 = vmatpush1.msra.mxu0 %v909
    %962 = vmatprep.subr.mxu0 0.0
    %963 = vmatpush1.msra.mxu0 %v908
    %964 = vmatprep.subr.mxu0 0.0
    %965 = vmatpush1.msra.mxu0 %v907
    %966 = vmatprep.subr.mxu0 0.0
    %967 = vmatpush1.msra.mxu0 %v906
    %968 = vmatprep.subr.mxu0 0.0
    %969 = vmatpush1.msra.mxu0 %v905
    %970 = vmatprep.subr.mxu0 0.0
    %971 = vmatpush1.msra.mxu0 %v904
    %972 = vmatprep.subr.mxu0 0.0
    %973 = vmatpush2.msra.mxu0 %v935
    %974 = vmatprep.subr.mxu0 0.0
    %975 = vmatpush2.msra.mxu0 %v934
    %976 = vmatprep.subr.mxu0 0.0
    %977 = vmatpush2.msra.mxu0 %v933
    %978 = vmatprep.subr.mxu0 0.0
    %979 = vmatpush2.msra.mxu0 %v932
    %980 = vmatprep.subr.mxu0 0.0
    %981 = vmatpush2.msra.mxu0 %v931
    %982 = vmatprep.subr.mxu0 0.0
    %983 = vmatpush2.msra.mxu0 %v930
    %984 = vmatprep.subr.mxu0 0.0
    %985 = vmatpush2.msra.mxu0 %v929
    %986 = vmatprep.subr.mxu0 0.0
    %987 = vmatpush2.msra.mxu0 %v928
    %988 = vmatprep.subr.mxu0 0.0
    %989 = vmatpush2.msra.mxu0 %v927
    %990 = vmatprep.subr.mxu0 0.0
    %991 = vmatpush2.msra.mxu0 %v926
    %992 = vmatprep.subr.mxu0 0.0
    %993 = vmatpush2.msra.mxu0 %v925
    %994 = vmatprep.subr.mxu0 0.0
    %995 = vmatpush2.msra.mxu0 %v924
    %996 = vmatprep.subr.mxu0 0.0
    %997 = vmatpush2.msra.mxu0 %v923
    %998 = vmatprep.subr.mxu0 0.0
    %999 = vmatpush2.msra.mxu0 %v922
    %1000 = vmatprep.subr.mxu0 0.0
    %1001 = vmatpush2.msra.mxu0 %v921
    %1002 = vmatprep.subr.mxu0 0.0
    %1003 = vmatpush2.msra.mxu0 %v920
    %1004 = vmatprep.mubr.f32.mxu0 %v900
    %1005 = vmatmul.mubr.f32.gmra.mxu0 %v899
    %v1006 = vpop.f32.mrf.mxu0
    %v1007 = vadd.f32 %v939, %v1006
    %v1008 = vpop.f32.mrf.mxu0
    %1009 = vdwg.mxu0
    %v1010 = vxor.u32 %v1007, 2147483648
    %v1011 = vmul.f32 %v1010, 1.442695
    %v1012 = vpow.pop %v1011
    %v1013 = vadd.f32 %v1012, 1.0
    %v1014 = vrcp.pop %v1013
    %v1015 = vmul.f32 1.0, %v1014
    %v1016 = vlaneseq
    %v1017 = vshrl.u32 %v1016, 7
    %v1018 = vsub.s32 0, %v1017
    %v1019 = vrot.slane %v902, %v1018
    %v1020 = vmul.f32 %v1015, %v1019
    %vm1021 = vcmask 523264
    %v1022 = vsel %vm1021, %v1020, 0.0
    %1023 = vadd.xlane.f32.xlu0 %v1022
    %v1024 = vpop.xlane.xlu0 %1023
    %v1025 = vlaneseq
    %v1026 = vshrl.u32 %v1025, 7
    %v1027 = vsub.s32 0, %v1026
    %v1028 = vrot.slane %v903, %v1027
    %v1029 = vadd.f32 %v1024, %v1028
    %1031 = vset.pattern.permute.xlu0 0
    %1032 = vperm.xlu0 %1031, %v1029
    %v1033 = vpop.permute.xlu0 %1032
    %1035 = vst [vmem:[%s5] sm:$0xff] %v1033
    // Predicated region
    $region26: #{rnn_forward.1} parent=1 // pred_check
      _
    $region27: #{rnn_forward.1} parent=1 // pred_check_branch
      %1037 = sbr.rel (0) target = $region29
    $region28: #{rnn_forward.1} parent=1 // pred_region
      _
    $region29: #{rnn_forward.1} parent=1 // pred_fallthru
      _
    // Predicated region
    $region30: #{rnn_forward.1} parent=1 // pred_check
      _
    $region31: #{rnn_forward.1} parent=1 // pred_check_branch
      %1039 = sbr.rel (0) target = $region33
    $region32: #{rnn_forward.1} parent=1 // pred_region
      _
    $region33: #{rnn_forward.1} parent=1 // pred_fallthru
      _
    %1040 = vsyncpa [#allocation3], 1

</llo_original>
